<compile_context>
chip_gen: v7x
topology: tpu7x:2x2x1
jax: 0.10.0
libtpu: 0.0.40
codegen_flags: <defaults>
</compile_context>

<pallas_src>
import functools
import math

import numpy as np
import jax
import jax.numpy as jnp
from jax.experimental import pallas as pl
from jax.experimental.pallas import tpu as pltpu

_A = -0.75  # PyTorch bicubic convolution coefficient


def _cubic1(t):
    return ((_A + 2.0) * t - (_A + 3.0)) * t * t + 1.0


def _cubic2(t):
    return ((_A * t - 5.0 * _A) * t + 8.0 * _A) * t - 4.0 * _A


def bicubic_upsample_matrix(out_size, in_size):
    """U (out,in) s.t. U @ v == F.interpolate(v, mode='bicubic', align_corners=False)."""
    U = np.zeros((out_size, in_size), dtype=np.float64)
    scale = in_size / out_size
    for o in range(out_size):
        real = (o + 0.5) * scale - 0.5            # cubic keeps negative coords
        i0 = int(np.floor(real))
        t = real - i0
        w = (_cubic2(t + 1.0), _cubic1(t), _cubic1(1.0 - t), _cubic2(2.0 - t))
        for k in range(4):
            idx = min(max(i0 - 1 + k, 0), in_size - 1)   # edge-clamped taps
            U[o, idx] += w[k]
    return U.astype(np.float32)


def _pick_row_tile(H, W, min_lanes=512, max_lanes=1024):
    """Rows per output tile.

    TR must divide H and keep the flat output tile lane-dense (TR*W % 128 == 0),
    unless TR == H (full-dim exemption).  Prefer the smallest sublane-aligned TR
    (TR % 8 == 0) with at least `min_lanes` lanes so the scanned band stays small.
    """
    m = 128 // math.gcd(W, 128)
    cands = [tr for tr in range(1, H + 1) if H % tr == 0 and tr % m == 0]
    if not cands:
        return H                                   # block dim == full array dim is legal
    tier1 = [tr for tr in cands if tr % 8 == 0 and min_lanes <= tr * W <= max_lanes]
    if tier1:
        return min(tier1)
    tier2 = [tr for tr in cands if min_lanes <= tr * W <= max_lanes]
    if tier2:
        return min(tier2)
    tier3 = [tr for tr in cands if tr * W <= max_lanes]
    if tier3:
        return max(tier3)                          # small images: one big lane-dense tile
    return min(cands)                              # very wide rows: fewest rows per tile


def _row_band(theta_row, H):
    """Static bound on |round(sy) - output_row| (bicubic overshoot included)."""
    overshoot = 1.375 ** 2                          # max per-axis sum|w| for a=-0.75, squared
    r = H / (H - 1) if H > 1 else 1.0
    return int(math.ceil(2.0 + overshoot * float(theta_row) * r)) + 1


def _elastic_warp_kernel(idx_ref, src_ref, out_ref, *, H, W, TR, BR, nb, compute_dtype):
    # idx_ref : (1, 2, TRW) int32  rounded source (row, col) per output pixel; -1 => zero pad
    # src_ref : (1, C, H, W)       full image of this batch sample (resident across tiles)
    # out_ref : (1, C, TRW)        lane-dense output tile
    TRW = TR * W
    C = src_ref.shape[1]
    t = pl.program_id(1)

    iy = idx_ref[0, 0:1, :]                                     # (1, TRW) int32
    ix = idx_ref[0, 1:2, :]                                     # (1, TRW) int32

    if BR >= H:
        row_start = 0                                           # exact: scan all source rows
    else:
        row_start = jnp.clip((t - nb) * TR, 0, H - BR)          # multiple of TR by construction
        row_start = pl.multiple_of(row_start, TR & -TR)         # power-of-two alignment hint

    # Column one-hot selection (fed to the MXU); invalid pixels (ix == -1) select nothing.
    col_iota = jax.lax.broadcasted_iota(jnp.int32, (W, TRW), 0)
    colsel = (col_iota == ix).astype(compute_dtype)             # (W, TRW)

    # Row mask for the cheap VPU reduce over the band rows.
    row_iota = jax.lax.broadcasted_iota(jnp.int32, (BR, TRW), 0)
    rowmask = ((row_iota + row_start) == iy).astype(jnp.float32)  # (BR, TRW)

    for c in range(C):                                          # C small & static -> unrolled
        band = src_ref[0, c, pl.ds(row_start, BR), :]           # (BR, W)
        if band.dtype != compute_dtype:
            band = band.astype(compute_dtype)
        gathered = jnp.dot(band, colsel, preferred_element_type=jnp.float32)  # (BR, TRW)
        out_c = jnp.sum(gathered * rowmask, axis=0, keepdims=True)            # (1, TRW)
        out_ref[0, c:c + 1, :] = out_c.astype(out_ref.dtype)


def elastic_tf_forward(x, aug_flow, theta=None):
    """Elastic_TF.forward (flip_ax=None) — returns (warped_x, aug_flow)."""
    # TODO(synk): flip_ax random per-sample flips not implemented (module default flip_ax=None).
    N, C, H, W = x.shape
    gH, gW = aug_flow.shape[2], aug_flow.shape[3]
    HW = H * W

    # ---- hoisted: bicubic flow upsample + folded grid_sample normalize/unnormalize ----
    uh = jnp.asarray(bicubic_upsample_matrix(H, gH))            # (H, gH)
    uw = jnp.asarray(bicubic_upsample_matrix(W, gW))            # (W, gW)
    flow = aug_flow.astype(jnp.float32)
    fy = jnp.einsum('hg,ngk,wk->nhw', uh, flow[:, 0], uw, precision='highest')
    fx = jnp.einsum('hg,ngk,wk->nhw', uh, flow[:, 1], uw, precision='highest')
    ry = H / (H - 1) if H > 1 else 1.0
    rx = W / (W - 1) if W > 1 else 1.0
    gy = jnp.arange(H, dtype=jnp.float32)[None, :, None]
    gx = jnp.arange(W, dtype=jnp.float32)[None, None, :]
    sy = (gy + fy) * ry - 0.5                                   # folded grid_sample unnormalize
    sx = (gx + fx) * rx - 0.5

    # ---- hoisted: nearest rounding + zeros-padding validity -> int32 indices ----
    iy_f = jnp.round(sy)                                        # ties-to-even (ties masked in test)
    ix_f = jnp.round(sx)
    valid = (iy_f >= 0) & (iy_f <= H - 1) & (ix_f >= 0) & (ix_f <= W - 1)
    iy_i = jnp.where(valid, jnp.clip(iy_f, 0, H - 1).astype(jnp.int32), -1)
    ix_i = jnp.where(valid, jnp.clip(ix_f, 0, W - 1).astype(jnp.int32), -1)
    idx = jnp.stack([iy_i, ix_i], axis=1).reshape(N, 2, HW)     # (N, 2, HW) int32

    # ---- tiling & static source-row band ----
    TR = _pick_row_tile(H, W)
    TRW = TR * W
    NT = H // TR
    if theta is None:
        BR, nb = H, 0                                           # exact path: scan every row
    else:
        theta_row = float(theta[0]) if isinstance(theta, (tuple, list)) else float(theta)
        B = _row_band(theta_row, H)
        nb = -(-B // TR)
        if 2 * nb + 1 >= NT:
            BR, nb = H, 0
        else:
            BR = (2 * nb + 1) * TR
    # NOTE: static band assumes |aug_flow| <= theta; pass theta=None for the exact full band.

    compute_dtype = jnp.bfloat16 if x.dtype == jnp.bfloat16 else jnp.float32

    kernel = functools.partial(_elastic_warp_kernel, H=H, W=W, TR=TR, BR=BR, nb=nb,
                               compute_dtype=compute_dtype)

    out_flat = pl.pallas_call(
        kernel,
        out_shape=jax.ShapeDtypeStruct((N, C, HW), x.dtype),
        grid_spec=pltpu.PrefetchScalarGridSpec(
            num_scalar_prefetch=0,
            grid=(N, NT),
            in_specs=[
                pl.BlockSpec((1, 2, TRW), lambda n, t: (n, 0, t)),      # per-tile indices
                pl.BlockSpec((1, C, H, W), lambda n, t: (n, 0, 0, 0)),  # whole image, DMA'd once per n
            ],
            out_specs=pl.BlockSpec((1, C, TRW), lambda n, t: (n, 0, t)),
        ),
        compiler_params=pltpu.CompilerParams(
            dimension_semantics=("parallel", "parallel"),
            vmem_limit_bytes=40 * 1024 * 1024,                  # safe on v5e/v6e/v7x
        ),
    )(idx, x)

    return out_flat.reshape(N, C, H, W), aug_flow


def _reference_forward(x, aug_flow):
    """Pure-JAX reference (same math). Returns (out, rounding_tie_mask)."""
    N, C, H, W = x.shape
    gH, gW = aug_flow.shape[2], aug_flow.shape[3]
    uh = jnp.asarray(bicubic_upsample_matrix(H, gH))
    uw = jnp.asarray(bicubic_upsample_matrix(W, gW))
    fy = jnp.einsum('hg,ngk,wk->nhw', uh, aug_flow[:, 0], uw, precision='highest')
    fx = jnp.einsum('hg,ngk,wk->nhw', uh, aug_flow[:, 1], uw, precision='highest')
    gy = jnp.arange(H, dtype=jnp.float32)[None, :, None]
    gx = jnp.arange(W, dtype=jnp.float32)[None, None, :]
    ny = 2.0 * ((gy + fy) / (H - 1) - 0.5)
    nx = 2.0 * ((gx + fx) / (W - 1) - 0.5)
    sy = ((ny + 1.0) * H - 1.0) * 0.5
    sx = ((nx + 1.0) * W - 1.0) * 0.5
    iy = jnp.round(sy)
    ix = jnp.round(sx)
    valid = (iy >= 0) & (iy <= H - 1) & (ix >= 0) & (ix <= W - 1)
    q = (jnp.clip(iy, 0, H - 1).astype(jnp.int32) * W
         + jnp.clip(ix, 0, W - 1).astype(jnp.int32))
    xf = x.reshape(N, C, H * W)
    gathered = jnp.take_along_axis(xf, q.reshape(N, 1, H * W), axis=2)
    out = jnp.where(valid.reshape(N, 1, H * W), gathered, 0.0).reshape(N, C, H, W)
    fr_y = sy - jnp.floor(sy)
    fr_x = sx - jnp.floor(sx)
    tie = (jnp.abs(fr_y - 0.5) < 0.1) | (jnp.abs(fr_x - 0.5) < 0.1)   # (N, H, W)
    return out, tie


if __name__ == "__main__":
    def run_case(key, N, C, H, W, grid_size, theta):
        kx, kf = jax.random.split(key)
        x = jax.random.normal(kx, (N, C, H, W), dtype=jnp.float32)
        aug_flow = (jax.random.uniform(kf, (N, 2) + grid_size, dtype=jnp.float32) - 0.5) * 2.0 \
                   * jnp.asarray(theta, jnp.float32).reshape(1, 2, 1, 1)
        warped, flow_out = elastic_tf_forward(x, aug_flow, theta=theta)
        warped = jax.block_until_ready(warped)
        ref, tie = _reference_forward(x, aug_flow)
        assert warped.shape == (N, C, H, W)
        assert flow_out.shape == (N, 2) + grid_size
        ok = jnp.where(tie[:, None, :, :], True, jnp.abs(warped - ref) <= 0.05)
        assert bool(jnp.all(ok)), f"kernel output mismatch vs reference at {(N, C, H, W)}"

    key = jax.random.PRNGKey(0)
    k1, k2 = jax.random.split(key)
    # small case: single output tile per sample, full source band (TR=16, NT=1)
    run_case(k1, N=2, C=4, H=16, W=16, grid_size=(4, 4), theta=(3.0, 3.0))
    # tiled + row-banded case exercising the clamped in-kernel band slice (TR=8, NT=8, band=24 rows)
    run_case(k2, N=2, C=3, H=64, W=64, grid_size=(6, 6), theta=(2.0, 2.0))
    print("KERNEL_OK")
</pallas_src>

<mosaic_0001>
module attributes {stable_mosaic.version = 11 : i64} {
  func.func @_elastic_warp_kernel(%arg0: i32, %arg1: i32, %arg2: memref<1x2x256xi32, #tpu.memory_space<vmem>>, %arg3: memref<1x4x16x16xf32, #tpu.memory_space<vmem>>, %arg4: memref<1x4x256xf32, #tpu.memory_space<vmem>>) attributes {dimension_semantics = [#tpu.dimension_semantics<parallel>, #tpu.dimension_semantics<parallel>], iteration_bounds = array<i64: 2, 1>, scalar_prefetch = 0 : i64, scratch_operands = 0 : i64, tpu.core_type = #tpu.core_type<tc>, window_params = [{transform_indices = @transform_0, window_bounds = array<i64: 1, 2, 256>}, {transform_indices = @transform_1, window_bounds = array<i64: 1, 4, 16, 16>}, {transform_indices = @transform_2, window_bounds = array<i64: 1, 4, 256>}]} {
    %c0 = arith.constant 0 : index
    %c0_0 = arith.constant 0 : index
    %c0_1 = arith.constant 0 : index
    %0 = vector.load %arg2[%c0, %c0_0, %c0_1] : memref<1x2x256xi32, #tpu.memory_space<vmem>>, vector<1x1x256xi32>
    %1 = vector.shape_cast %0 : vector<1x1x256xi32> to vector<1x256xi32>
    %c0_2 = arith.constant 0 : index
    %c1 = arith.constant 1 : index
    %c0_3 = arith.constant 0 : index
    %2 = vector.load %arg2[%c0_2, %c1, %c0_3] : memref<1x2x256xi32, #tpu.memory_space<vmem>>, vector<1x1x256xi32>
    %3 = vector.shape_cast %2 : vector<1x1x256xi32> to vector<1x256xi32>
    %4 = tpu.iota {dimensions = array<i32: 0>} : vector<16x256xi32>
    %5 = vector.broadcast %3 : vector<1x256xi32> to vector<16x256xi32>
    %6 = arith.cmpi eq, %4, %5 : vector<16x256xi32>
    %7 = arith.extui %6 : vector<16x256xi1> to vector<16x256xi32>
    %8 = arith.sitofp %7 : vector<16x256xi32> to vector<16x256xf32>
    %9 = tpu.iota {dimensions = array<i32: 0>} : vector<16x256xi32>
    %c0_i32 = arith.constant 0 : i32
    %10 = vector.broadcast %c0_i32 : i32 to vector<16x256xi32>
    %11 = arith.addi %9, %10 : vector<16x256xi32>
    %12 = vector.broadcast %1 : vector<1x256xi32> to vector<16x256xi32>
    %13 = arith.cmpi eq, %11, %12 : vector<16x256xi32>
    %14 = arith.extui %13 : vector<16x256xi1> to vector<16x256xi32>
    %15 = arith.sitofp %14 : vector<16x256xi32> to vector<16x256xf32>
    %c0_4 = arith.constant 0 : index
    %c0_5 = arith.constant 0 : index
    %c0_6 = arith.constant 0 : index
    %c0_7 = arith.constant 0 : index
    %16 = vector.load %arg3[%c0_4, %c0_5, %c0_6, %c0_7] : memref<1x4x16x16xf32, #tpu.memory_space<vmem>>, vector<1x1x16x16xf32>
    %17 = vector.shape_cast %16 : vector<1x1x16x16xf32> to vector<16x16xf32>
    %cst = arith.constant dense<0.000000e+00> : vector<16x256xf32>
    %18 = tpu.matmul %17, %8, %cst {dimension_numbers = #tpu.dot_dimension_numbers<[1], [0], [0], [1], [0, 0, 1, 1], [], []>} : vector<16x16xf32>, vector<16x256xf32>, vector<16x256xf32> -> vector<16x256xf32>
    %19 = arith.mulf %18, %15 : vector<16x256xf32>
    %cst_8 = arith.constant dense<0.000000e+00> : vector<256xf32>
    %20 = vector.multi_reduction <add>, %19, %cst_8 [0] : vector<16x256xf32> to vector<256xf32>
    %21 = vector.shape_cast %20 : vector<256xf32> to vector<1x256xf32>
    %c0_9 = arith.constant 0 : index
    %c0_10 = arith.constant 0 : index
    %c0_11 = arith.constant 0 : index
    %22 = vector.load %arg4[%c0_9, %c0_10, %c0_11] : memref<1x4x256xf32, #tpu.memory_space<vmem>>, vector<1x1x256xf32>
    %23 = vector.shape_cast %22 : vector<1x1x256xf32> to vector<1x256xf32>
    %24 = vector.shape_cast %21 : vector<1x256xf32> to vector<1x1x256xf32>
    tpu.vector_store %arg4[%c0_9, %c0_10, %c0_11], %24 {strides = array<i32>} : memref<1x4x256xf32, #tpu.memory_space<vmem>>, vector<1x1x256xf32>,
    %c0_12 = arith.constant 0 : index
    %c1_13 = arith.constant 1 : index
    %c0_14 = arith.constant 0 : index
    %c0_15 = arith.constant 0 : index
    %25 = vector.load %arg3[%c0_12, %c1_13, %c0_14, %c0_15] : memref<1x4x16x16xf32, #tpu.memory_space<vmem>>, vector<1x1x16x16xf32>
    %26 = vector.shape_cast %25 : vector<1x1x16x16xf32> to vector<16x16xf32>
    %cst_16 = arith.constant dense<0.000000e+00> : vector<16x256xf32>
    %27 = tpu.matmul %26, %8, %cst_16 {dimension_numbers = #tpu.dot_dimension_numbers<[1], [0], [0], [1], [0, 0, 1, 1], [], []>} : vector<16x16xf32>, vector<16x256xf32>, vector<16x256xf32> -> vector<16x256xf32>
    %28 = arith.mulf %27, %15 : vector<16x256xf32>
    %cst_17 = arith.constant dense<0.000000e+00> : vector<256xf32>
    %29 = vector.multi_reduction <add>, %28, %cst_17 [0] : vector<16x256xf32> to vector<256xf32>
    %30 = vector.shape_cast %29 : vector<256xf32> to vector<1x256xf32>
    %c0_18 = arith.constant 0 : index
    %c1_19 = arith.constant 1 : index
    %c0_20 = arith.constant 0 : index
    %31 = vector.load %arg4[%c0_18, %c1_19, %c0_20] : memref<1x4x256xf32, #tpu.memory_space<vmem>>, vector<1x1x256xf32>
    %32 = vector.shape_cast %31 : vector<1x1x256xf32> to vector<1x256xf32>
    %33 = vector.shape_cast %30 : vector<1x256xf32> to vector<1x1x256xf32>
    tpu.vector_store %arg4[%c0_18, %c1_19, %c0_20], %33 {strides = array<i32>} : memref<1x4x256xf32, #tpu.memory_space<vmem>>, vector<1x1x256xf32>,
    %c0_21 = arith.constant 0 : index
    %c2 = arith.constant 2 : index
    %c0_22 = arith.constant 0 : index
    %c0_23 = arith.constant 0 : index
    %34 = vector.load %arg3[%c0_21, %c2, %c0_22, %c0_23] : memref<1x4x16x16xf32, #tpu.memory_space<vmem>>, vector<1x1x16x16xf32>
    %35 = vector.shape_cast %34 : vector<1x1x16x16xf32> to vector<16x16xf32>
    %cst_24 = arith.constant dense<0.000000e+00> : vector<16x256xf32>
    %36 = tpu.matmul %35, %8, %cst_24 {dimension_numbers = #tpu.dot_dimension_numbers<[1], [0], [0], [1], [0, 0, 1, 1], [], []>} : vector<16x16xf32>, vector<16x256xf32>, vector<16x256xf32> -> vector<16x256xf32>
    %37 = arith.mulf %36, %15 : vector<16x256xf32>
    %cst_25 = arith.constant dense<0.000000e+00> : vector<256xf32>
    %38 = vector.multi_reduction <add>, %37, %cst_25 [0] : vector<16x256xf32> to vector<256xf32>
    %39 = vector.shape_cast %38 : vector<256xf32> to vector<1x256xf32>
    %c0_26 = arith.constant 0 : index
    %c2_27 = arith.constant 2 : index
    %c0_28 = arith.constant 0 : index
    %40 = vector.load %arg4[%c0_26, %c2_27, %c0_28] : memref<1x4x256xf32, #tpu.memory_space<vmem>>, vector<1x1x256xf32>
    %41 = vector.shape_cast %40 : vector<1x1x256xf32> to vector<1x256xf32>
    %42 = vector.shape_cast %39 : vector<1x256xf32> to vector<1x1x256xf32>
    tpu.vector_store %arg4[%c0_26, %c2_27, %c0_28], %42 {strides = array<i32>} : memref<1x4x256xf32, #tpu.memory_space<vmem>>, vector<1x1x256xf32>,
    %c0_29 = arith.constant 0 : index
    %c3 = arith.constant 3 : index
    %c0_30 = arith.constant 0 : index
    %c0_31 = arith.constant 0 : index
    %43 = vector.load %arg3[%c0_29, %c3, %c0_30, %c0_31] : memref<1x4x16x16xf32, #tpu.memory_space<vmem>>, vector<1x1x16x16xf32>
    %44 = vector.shape_cast %43 : vector<1x1x16x16xf32> to vector<16x16xf32>
    %cst_32 = arith.constant dense<0.000000e+00> : vector<16x256xf32>
    %45 = tpu.matmul %44, %8, %cst_32 {dimension_numbers = #tpu.dot_dimension_numbers<[1], [0], [0], [1], [0, 0, 1, 1], [], []>} : vector<16x16xf32>, vector<16x256xf32>, vector<16x256xf32> -> vector<16x256xf32>
    %46 = arith.mulf %45, %15 : vector<16x256xf32>
    %cst_33 = arith.constant dense<0.000000e+00> : vector<256xf32>
    %47 = vector.multi_reduction <add>, %46, %cst_33 [0] : vector<16x256xf32> to vector<256xf32>
    %48 = vector.shape_cast %47 : vector<256xf32> to vector<1x256xf32>
    %c0_34 = arith.constant 0 : index
    %c3_35 = arith.constant 3 : index
    %c0_36 = arith.constant 0 : index
    %49 = vector.load %arg4[%c0_34, %c3_35, %c0_36] : memref<1x4x256xf32, #tpu.memory_space<vmem>>, vector<1x1x256xf32>
    %50 = vector.shape_cast %49 : vector<1x1x256xf32> to vector<1x256xf32>
    %51 = vector.shape_cast %48 : vector<1x256xf32> to vector<1x1x256xf32>
    tpu.vector_store %arg4[%c0_34, %c3_35, %c0_36], %51 {strides = array<i32>} : memref<1x4x256xf32, #tpu.memory_space<vmem>>, vector<1x1x256xf32>,
    return
  }
  func.func @transform_0(%arg0: i32, %arg1: i32) -> (i32, i32, i32) {
    %c0_i32 = arith.constant 0 : i32
    %c0_i32_0 = arith.constant 0 : i32
    return %arg0, %c0_i32, %arg1 : i32, i32, i32
  }
  func.func @transform_1(%arg0: i32, %arg1: i32) -> (i32, i32, i32, i32) {
    %c0_i32 = arith.constant 0 : i32
    %c0_i32_0 = arith.constant 0 : i32
    %c0_i32_1 = arith.constant 0 : i32
    %c0_i32_2 = arith.constant 0 : i32
    return %arg0, %c0_i32, %c0_i32_0, %c0_i32_1 : i32, i32, i32, i32
  }
  func.func @transform_2(%arg0: i32, %arg1: i32) -> (i32, i32, i32) {
    %c0_i32 = arith.constant 0 : i32
    %c0_i32_0 = arith.constant 0 : i32
    return %arg0, %c0_i32, %arg1 : i32, i32, i32
  }
}

</mosaic_0001>

<llo_original>
// kernel: tpu_custom_call.1
$region0: #{tpu_custom_call.1}
  #allocation0 [shape = 'u32[]', space=smem, size = 0x4, offset = 0x4, fixed_abs, tag = 'smem constant byte address 0x4 - core index']
  #allocation1 [shape = 'u32[144,128]{1,0:T(1,128)}', space=vmem, size = 0x12000, scoped, tag = 'internal scratch']
  %s0 = inlined_call_operand.hbm [shape: s32[2,2,256], index: 0, kind: input, shape index: {}]
  %s1 = inlined_call_operand.hbm [shape: f32[2,4,16,16], index: 1, kind: input, shape index: {}]
  %s2 = inlined_call_operand.hbm [shape: f32[2,4,256], index: 2, kind: output, shape index: {}]
  %s3 = sld [smem:[#allocation0]]
  $region49: #{tpu_custom_call.1} parent=0
    _
  %s5 = ssub.s32 1, %s3
  %s6 = scalar_select 0, %s5, %s3
  $region1: #{tpu_custom_call.1} parent=0
    #allocation2 [shape = 'u8[4096]{0}', space=vmem, size = 0x1000, scoped, tag = 'input window, operand 0']
    #allocation3 [shape = 's32[2]{0}', space=sflag, size = 0x8, scoped, tag = 'scoped memory for tpu_custom_call.1']
    #allocation4 [shape = 's32[2]{0}', space=sflag, size = 0x8, scoped, tag = 'scoped memory for tpu_custom_call.1']
    #allocation5 [shape = 'u8[65536]{0}', space=vmem, size = 0x10000, scoped, tag = 'input window, operand 1']
    #allocation6 [shape = 's32[2]{0}', space=sflag, size = 0x8, scoped, tag = 'scoped memory for tpu_custom_call.1']
    #allocation7 [shape = 'u8[8192]{0}', space=vmem, size = 0x2000, scoped, tag = 'output window, operand 0']
    %7 = vsyncpa [#allocation3], 0
    %s8 = scalar_lea.sflag [#allocation3], 1
    %9 = vsyncpa %s8, 0
    %10 = vsyncpa [#allocation6], 0
    %s11 = scalar_lea.sflag [#allocation6], 1
    %12 = vsyncpa %s11, 0
    %13 = vsyncpa [#allocation4], 0
    %s14 = scalar_lea.sflag [#allocation4], 1
    %15 = vsyncpa %s14, 0
    loop: start=0, step=1, limit=4
    $region2: #{tpu_custom_call.1} parent=1 // loop_pre_header
      _
    $region3: #{tpu_custom_call.1} parent=1 // loop_header
      %s17 = sphi 0, %s21
      %p18 = scmp.ge.s32.totalorder %s17, 4
      %s24 = sphi 0, %s36
      %s25 = sphi 0, %s32
      %s26 = sphi 0, %s24
      %s27 = sphi 0, %s25
      %s28 = sphi 0, %s26
      %s29 = sphi 0, %s27
      %s41 = sphi 0, %s43
      %s44 = sphi 0, %s41
      %s45 = sphi 0, %s44
      %s61 = sphi 0, %s45
      %s67 = sphi 0, %s69
      %s70 = sphi 0, %s67
      %s71 = sphi 0, %s70
      %s87 = sphi 0, %s71
      %s95 = sphi 0, %s97
      %s98 = sphi 0, %s95
      %s99 = sphi 0, %s98
      %s115 = sphi 0, %s99
    $region4: #{tpu_custom_call.1} parent=1 // loop_header_branch
      %20 = sbr.rel (%p18) target = $region8
    $region5: #{tpu_custom_call.1} parent=1 // loop_body
      %s22 = ssub.s32 %s17, 1
      %s23 = ssub.s32 %s17, 2
      %s30 = sadd.s32 1, %s25
      %p31 = scmp.ge.s32.totalorder %s30, 1
      %s32 = scalar_select %p31, 0, %s30
      %s33 = sadd.s32 1, %s24
      %s34 = scalar_select %p31, %s33, %s24
      %p35 = scmp.ge.s32.totalorder %s34, 2
      %s36 = scalar_select %p35, 0, %s34
      %s37 = ssub.s32 %s24, %s36
      %s38 = ssub.s32 %s25, %s32
      %s39 = sor.u32 %s37, %s38
      %p40 = scmp.eq.s32.totalorder %s39, 0
      %s42 = sadd.s32 %s41, 1
      %s43 = scalar_select %p40, %s41, %s42
      %p46 = pneg %p40
      %p47 = scmp.eq.s32.totalorder %s17, 1
      %p48 = por %p46, %p47
      %p49 = scmp.ne.s32.totalorder %s41, %s44
      %p50 = scmp.eq.s32.totalorder %s17, 0
      %p51 = por %p49, %p50
      %p52 = scmp.ne.s32.totalorder %s41, %s44
      %p53 = scmp.eq.s32.totalorder %s22, 1
      %p54 = por %p52, %p53
      %p55 = scmp.ne.s32.totalorder %s44, %s45
      %p56 = scmp.eq.s32.totalorder %s22, 0
      %p57 = por %p55, %p56
      %p58 = scmp.ne.s32.totalorder %s44, %s45
      %p59 = scmp.eq.s32.totalorder %s23, 1
      %p60 = por %p58, %p59
      %p62 = scmp.ne.s32.totalorder %s45, %s61
      %p63 = scmp.eq.s32.totalorder %s23, 0
      %p64 = por %p62, %p63
      %s65 = ssub.s32 %s24, %s36
      %p66 = scmp.eq.s32.totalorder %s65, 0
      %s68 = sadd.s32 %s67, 1
      %s69 = scalar_select %p66, %s67, %s68
      %p72 = pneg %p66
      %p73 = scmp.eq.s32.totalorder %s17, 1
      %p74 = por %p72, %p73
      %p75 = scmp.ne.s32.totalorder %s67, %s70
      %p76 = scmp.eq.s32.totalorder %s17, 0
      %p77 = por %p75, %p76
      %p78 = scmp.ne.s32.totalorder %s67, %s70
      %p79 = scmp.eq.s32.totalorder %s22, 1
      %p80 = por %p78, %p79
      %p81 = scmp.ne.s32.totalorder %s70, %s71
      %p82 = scmp.eq.s32.totalorder %s22, 0
      %p83 = por %p81, %p82
      %p84 = scmp.ne.s32.totalorder %s70, %s71
      %p85 = scmp.eq.s32.totalorder %s23, 1
      %p86 = por %p84, %p85
      %p88 = scmp.ne.s32.totalorder %s71, %s87
      %p89 = scmp.eq.s32.totalorder %s23, 0
      %p90 = por %p88, %p89
      %s91 = ssub.s32 %s24, %s36
      %s92 = ssub.s32 %s25, %s32
      %s93 = sor.u32 %s91, %s92
      %p94 = scmp.eq.s32.totalorder %s93, 0
      %s96 = sadd.s32 %s95, 1
      %s97 = scalar_select %p94, %s95, %s96
      %p100 = pneg %p94
      %p101 = scmp.eq.s32.totalorder %s17, 1
      %p102 = por %p100, %p101
      %p103 = scmp.ne.s32.totalorder %s95, %s98
      %p104 = scmp.eq.s32.totalorder %s17, 0
      %p105 = por %p103, %p104
      %p106 = scmp.ne.s32.totalorder %s95, %s98
      %p107 = scmp.eq.s32.totalorder %s22, 1
      %p108 = por %p106, %p107
      %p109 = scmp.ne.s32.totalorder %s98, %s99
      %p110 = scmp.eq.s32.totalorder %s22, 0
      %p111 = por %p109, %p110
      %p112 = scmp.ne.s32.totalorder %s98, %s99
      %p113 = scmp.eq.s32.totalorder %s23, 1
      %p114 = por %p112, %p113
      %p116 = scmp.ne.s32.totalorder %s99, %s115
      %p117 = scmp.eq.s32.totalorder %s23, 0
      %p118 = por %p116, %p117
      %p119 = scmp.le.s32.totalorder 1, %s17
      %p120 = scmp.lt.s32.totalorder %s17, 3
      %p121 = pnand %p119, %p120
      %p122 = pneg %p121
      // Predicated region
      $region9: #{tpu_custom_call.1} parent=5 // pred_check
        _
      $region10: #{tpu_custom_call.1} parent=5 // pred_check_branch
        %124 = sbr.rel (%p121) target = $region12
      $region11: #{tpu_custom_call.1} parent=5 // pred_region
        %s125 = ssub.s32 %s17, 1
      $region12: #{tpu_custom_call.1} parent=5 // pred_fallthru
        _
      %p126 = scmp.lt.s32.totalorder %s17, 2
      // Predicated region
      $region13: #{tpu_custom_call.1} parent=5 // pred_check
        %p127 = pneg %p126
      $region14: #{tpu_custom_call.1} parent=5 // pred_check_branch
        %129 = sbr.rel (%p127) target = $region16
      $region15: #{tpu_custom_call.1} parent=5 // pred_region
        // Predicated region
        $region17: #{tpu_custom_call.1} parent=15 // pred_check
          %p130 = pneg %p51
        $region18: #{tpu_custom_call.1} parent=15 // pred_check_branch
          %132 = sbr.rel (%p130) target = $region20
        $region19: #{tpu_custom_call.1} parent=15 // pred_region
          %s133 = sand.u32 %s41, 1
          %s134 = scalar_lea.sflag [#allocation3], %s133
          %s135 = sand.u32 %s41, 1
          %s136 = smul.addr %s135, 4
          %s137 = scalar_lea.vmem [#allocation2], %s136
          %s138 = smul.u32 2, %s25
          %s140 = ssub.s32 64, 64
          %141 = vsyncadd %s134, %s140
          %s142 = smul.addr %s24, 2
          %s143 = sadd.s32 %s138, %s142
          %s144 = smul.addr %s143, 32
          %s145 = scalar_lea.hbm %s0, %s144
          %s147 = sshll.u32 %s137, 4
          %s148 = int_to_ptr.vmem [resolvable:$true] %s147
          %150 = dma.hbm_to_vmem [thread:$0]  %s145, 64, %s148, %s134
        $region20: #{tpu_custom_call.1} parent=15 // pred_fallthru
          _
        // Predicated region
        $region21: #{tpu_custom_call.1} parent=15 // pred_check
          %p151 = pneg %p77
        $region22: #{tpu_custom_call.1} parent=15 // pred_check_branch
          %153 = sbr.rel (%p151) target = $region24
        $region23: #{tpu_custom_call.1} parent=15 // pred_region
          %s154 = sand.u32 %s67, 1
          %s155 = scalar_lea.sflag [#allocation6], %s154
          %s156 = sand.u32 %s67, 1
          %s157 = smul.addr %s156, 64
          %s158 = scalar_lea.vmem [#allocation5], %s157
          %s160 = ssub.s32 1024, 1024
          %161 = vsyncadd %s155, %s160
          %s162 = smul.addr %s24, 8
          %s163 = smul.addr %s162, 128
          %s164 = scalar_lea.hbm %s1, %s163
          %s165 = sshll.u32 %s158, 4
          %s166 = int_to_ptr.vmem [resolvable:$true] %s165
          %171 = dma.hbm_to_vmem [thread:$0]  %s164, 1024, %s166, %s155, 128, 128, 8
        $region24: #{tpu_custom_call.1} parent=15 // pred_fallthru
          _
      $region16: #{tpu_custom_call.1} parent=5 // pred_fallthru
        _
      %p172 = scmp.le.s32.totalorder 1, %s17
      %p173 = scmp.lt.s32.totalorder %s17, 3
      %p174 = pnand %p172, %p173
      %p175 = pneg %p174
      // Predicated region
      $region25: #{tpu_custom_call.1} parent=5 // pred_check
        _
      $region26: #{tpu_custom_call.1} parent=5 // pred_check_branch
        %177 = sbr.rel (%p174) target = $region28
      $region27: #{tpu_custom_call.1} parent=5 // pred_region
        %s178 = ssub.s32 %s17, 1
        %s179 = sand.u32 %s44, 1
        %s180 = scalar_lea.sflag [#allocation3], %s179
        %s181 = sand.u32 %s44, 1
        %s182 = smul.addr %s181, 4
        %s183 = scalar_lea.vmem [#allocation2], %s182
        // Predicated region
        $region29: #{tpu_custom_call.1} parent=27 // pred_check
          %p184 = pneg %p57
        $region30: #{tpu_custom_call.1} parent=27 // pred_check_branch
          %186 = sbr.rel (%p184) target = $region32
        $region31: #{tpu_custom_call.1} parent=27 // pred_region
          %187 = dma.done %s180, 64
        $region32: #{tpu_custom_call.1} parent=27 // pred_fallthru
          _
        %s188 = sand.u32 %s70, 1
        %s189 = scalar_lea.sflag [#allocation6], %s188
        %s190 = sand.u32 %s70, 1
        %s191 = smul.addr %s190, 64
        %s192 = scalar_lea.vmem [#allocation5], %s191
        // Predicated region
        $region33: #{tpu_custom_call.1} parent=27 // pred_check
          %p193 = pneg %p83
        $region34: #{tpu_custom_call.1} parent=27 // pred_check_branch
          %195 = sbr.rel (%p193) target = $region36
        $region35: #{tpu_custom_call.1} parent=27 // pred_region
          %196 = dma.done %s189, 1024
        $region36: #{tpu_custom_call.1} parent=27 // pred_fallthru
          _
        %s197 = sand.u32 %s44, 1
        %s198 = scalar_lea.sflag [#allocation3], %s197
        %s199 = sand.u32 %s44, 1
        %s200 = smul.addr %s199, 4
        %s201 = scalar_lea.vmem [#allocation2], %s200
        %p202 = pneg %p57
        %p203 = pneg %p54
        %s204 = sand.u32 %s70, 1
        %s205 = scalar_lea.sflag [#allocation6], %s204
        %s206 = sand.u32 %s70, 1
        %s207 = smul.addr %s206, 64
        %s208 = scalar_lea.vmem [#allocation5], %s207
        %p209 = pneg %p83
        %p210 = pneg %p80
        %p211 = pneg %p111
        %p212 = pneg %p108
        %s213 = sand.u32 %s98, 1
        %s214 = scalar_lea.sflag [#allocation4], %s213
        %s215 = sand.u32 %s98, 1
        %s216 = smul.addr %s215, 8
        %s217 = scalar_lea.vmem [#allocation7], %s216
        %s218 = smul.u32 2, %s27
        %s219 = smul.u32 2, %s27
        %v220 = vld [vmem:[%s183] ss:$2 sm:$0x3]
        %s221 = scalar_lea.vmem %s183, 1 [#allocation2]
        %v222 = vld [vmem:[%s221] ss:$2 sm:$0x3]
        %v223 = vlaneseq
        %v224 = vshrl.u32 %v223, 7
        %v225 = vadd.s32 %v224, 8
        %v226 = vlaneseq
        %v227 = vshrl.u32 %v226, 7
        %v228 = vsub.s32 0, %v227
        %v229 = vrot.slane %v222, %v228
        %v230 = vlaneseq
        %v231 = vshrl.u32 %v230, 7
        %v232 = vsub.s32 1, %v231
        %v233 = vrot.slane %v222, %v232
        %vm234 = vcmp.eq.s32.totalorder %v224, %v229
        %vm235 = vcmp.eq.s32.totalorder %v224, %v233
        %vm236 = vcmp.eq.s32.totalorder %v225, %v229
        %vm237 = vcmp.eq.s32.totalorder %v225, %v233
        %v238 = vsel %vm234, 1, 0
        %v239 = vsel %vm235, 1, 0
        %v240 = vsel %vm236, 1, 0
        %v241 = vsel %vm237, 1, 0
        %v242 = vcvt.s32.f32 %v238
        %v243 = vcvt.s32.f32 %v239
        %v244 = vcvt.s32.f32 %v240
        %v245 = vcvt.s32.f32 %v241
        %v246 = vlaneseq
        %v247 = vshrl.u32 %v246, 7
        %v248 = vsub.s32 0, %v247
        %v249 = vrot.slane %v220, %v248
        %v250 = vlaneseq
        %v251 = vshrl.u32 %v250, 7
        %v252 = vsub.s32 1, %v251
        %v253 = vrot.slane %v220, %v252
        %vm254 = vcmp.eq.s32.totalorder %v224, %v249
        %vm255 = vcmp.eq.s32.totalorder %v224, %v253
        %vm256 = vcmp.eq.s32.totalorder %v225, %v249
        %vm257 = vcmp.eq.s32.totalorder %v225, %v253
        %v258 = vsel %vm254, 1, 0
        %v259 = vsel %vm255, 1, 0
        %v260 = vsel %vm256, 1, 0
        %v261 = vsel %vm257, 1, 0
        %v262 = vcvt.s32.f32 %v258
        %v263 = vcvt.s32.f32 %v259
        %v264 = vcvt.s32.f32 %v260
        %v265 = vcvt.s32.f32 %v261
        %v266 = vld [vmem:[%s192] sm:$0xff]
        %v267 = vld [vmem:[%s192 + $0x8] sm:$0xff]
        %vm268 = vcmask 130048
        %v270 = vsel %vm268, %v266, 0
        %v273 = vsel %vm268, %v267, 0
        %275 = vmatprep.subr.mxu0 %v243
        %276 = vmatpush1.msra.mxu0 %v242
        %277 = vmatprep.subr.mxu0 %v245
        %278 = vmatpush1.msra.mxu0 %v244
        %279 = vmatprep.subr.mxu0 0.0
        %280 = vmatpush1.msra.mxu0 0.0
        %281 = vmatprep.subr.mxu0 0.0
        %282 = vmatpush1.msra.mxu0 0.0
        %283 = vmatprep.subr.mxu0 0.0
        %284 = vmatpush1.msra.mxu0 0.0
        %285 = vmatprep.subr.mxu0 0.0
        %286 = vmatpush1.msra.mxu0 0.0
        %287 = vmatprep.subr.mxu0 0.0
        %288 = vmatpush1.msra.mxu0 0.0
        %289 = vmatprep.subr.mxu0 0.0
        %290 = vmatpush1.msra.mxu0 0.0
        %291 = vmatprep.subr.mxu0 0.0
        %292 = vmatpush1.msra.mxu0 0.0
        %293 = vmatprep.subr.mxu0 0.0
        %294 = vmatpush1.msra.mxu0 0.0
        %295 = vmatprep.subr.mxu0 0.0
        %296 = vmatpush1.msra.mxu0 0.0
        %297 = vmatprep.subr.mxu0 0.0
        %298 = vmatpush1.msra.mxu0 0.0
        %299 = vmatprep.subr.mxu0 0.0
        %300 = vmatpush1.msra.mxu0 0.0
        %301 = vmatprep.subr.mxu0 0.0
        %302 = vmatpush1.msra.mxu0 0.0
        %303 = vmatprep.subr.mxu0 0.0
        %304 = vmatpush1.msra.mxu0 0.0
        %305 = vmatprep.subr.mxu0 0.0
        %306 = vmatpush1.msra.mxu0 0.0
        %307 = vmatprep.subr.mxu0 0.0
        %308 = vmatpush1.msra.mxu0 0.0
        %309 = vmatprep.subr.mxu0 0.0
        %310 = vmatpush1.msra.mxu0 0.0
        %311 = vmatprep.subr.mxu0 0.0
        %312 = vmatpush1.msra.mxu0 0.0
        %313 = vmatprep.subr.mxu0 0.0
        %314 = vmatpush1.msra.mxu0 0.0
        %315 = vmatprep.subr.mxu0 0.0
        %316 = vmatpush1.msra.mxu0 0.0
        %317 = vmatprep.subr.mxu0 0.0
        %318 = vmatpush1.msra.mxu0 0.0
        %319 = vmatprep.subr.mxu0 0.0
        %320 = vmatpush1.msra.mxu0 0.0
        %321 = vmatprep.subr.mxu0 0.0
        %322 = vmatpush1.msra.mxu0 0.0
        %323 = vmatprep.subr.mxu0 0.0
        %324 = vmatpush1.msra.mxu0 0.0
        %325 = vmatprep.subr.mxu0 0.0
        %326 = vmatpush1.msra.mxu0 0.0
        %327 = vmatprep.subr.mxu0 0.0
        %328 = vmatpush1.msra.mxu0 0.0
        %329 = vmatprep.subr.mxu0 0.0
        %330 = vmatpush1.msra.mxu0 0.0
        %331 = vmatprep.subr.mxu0 0.0
        %332 = vmatpush1.msra.mxu0 0.0
        %333 = vmatprep.subr.mxu0 0.0
        %334 = vmatpush1.msra.mxu0 0.0
        %335 = vmatprep.subr.mxu0 0.0
        %336 = vmatpush1.msra.mxu0 0.0
        %337 = vmatprep.subr.mxu0 0.0
        %338 = vmatpush1.msra.mxu0 0.0
        %339 = vmatprep.mubr.f32.mxu0 0.0
        %340 = vmatmul.mubr.f32.gmra.mrb[0].mxu0 %v270
        %v341 = vpop.f32.mrb[0].mxu0
        %v342 = vadd.f32 0.0, %v341
        %v343 = vpop.f32.mrb[0].mxu0
        %v344 = vadd.f32 0.0, %v343
        %345 = vmatprep.mubr.f32.mxu0 0.0
        %346 = vmatmul.mubr.f32.gmra.mrb[0].mxu0 %v273
        %v347 = vpop.f32.mrb[0].mxu0
        %v348 = vadd.f32 0.0, %v347
        %v349 = vpop.f32.mrb[0].mxu0
        %v350 = vadd.f32 0.0, %v349
        %351 = vdwg.mxu0
        %v352 = vmul.f32 %v342, %v262
        %v353 = vmul.f32 %v344, %v263
        %v354 = vmul.f32 %v348, %v264
        %v355 = vmul.f32 %v350, %v265
        %v356 = vadd.f32 %v352, %v354
        %v357 = vrot.slane %v356, 4
        %v358 = vadd.f32 %v356, %v357
        %v359 = vrot.slane %v358, 2
        %v360 = vadd.f32 %v358, %v359
        %v361 = vrot.slane %v360, 1
        %v362 = vadd.f32 %v360, %v361
        %v363 = vadd.f32 %v353, %v355
        %v364 = vrot.slane %v363, 4
        %v365 = vadd.f32 %v363, %v364
        %v366 = vrot.slane %v365, 2
        %v367 = vadd.f32 %v365, %v366
        %v368 = vrot.slane %v367, 1
        %v369 = vadd.f32 %v367, %v368
        %v372 = vcombine.low %v362, %v369
        %v374 = vunpack.c.l.s4 1966171168
        %v375 = vunpack.c.0.s8 %v374
        %v376 = vlaneseq
        %v377 = vshrl.u32 %v376, 7
        %v378 = vsub.s32 %v375, %v377
        %v379 = vrot.slane %v372, %v378
        %v381 = vunpack.c.l.s4 1966171168
        %v382 = vunpack.c.0.s8 %v381
        %v383 = vlaneseq
        %v384 = vshrl.u32 %v383, 7
        %v385 = vsub.s32 %v382, %v384
        %v386 = vrot.slane %v379, %v385
        %v388 = vlaneseq
        %vm389 = vcmp.ge.s32.totalorder %v388, 0
        %vm390 = vcmp.lt.s32.totalorder %v388, 256
        %vm391 = vmand %vm389, %vm390
        %392 = vst.msk [vmem:[%s217] ss:$4 sm:$0x3] %vm391, %v386
        %s393 = scalar_lea.vmem %s192, 16 [#allocation5]
        %v394 = vld [vmem:[%s393] sm:$0xff]
        %v395 = vld [vmem:[%s393 + $0x8] sm:$0xff]
        %v397 = vsel %vm268, %v394, 0
        %v400 = vsel %vm268, %v395, 0
        %402 = vmatprep.subr.mxu0 %v243
        %403 = vmatpush1.msra.mxu0 %v242
        %404 = vmatprep.subr.mxu0 %v245
        %405 = vmatpush1.msra.mxu0 %v244
        %406 = vmatprep.subr.mxu0 0.0
        %407 = vmatpush1.msra.mxu0 0.0
        %408 = vmatprep.subr.mxu0 0.0
        %409 = vmatpush1.msra.mxu0 0.0
        %410 = vmatprep.subr.mxu0 0.0
        %411 = vmatpush1.msra.mxu0 0.0
        %412 = vmatprep.subr.mxu0 0.0
        %413 = vmatpush1.msra.mxu0 0.0
        %414 = vmatprep.subr.mxu0 0.0
        %415 = vmatpush1.msra.mxu0 0.0
        %416 = vmatprep.subr.mxu0 0.0
        %417 = vmatpush1.msra.mxu0 0.0
        %418 = vmatprep.subr.mxu0 0.0
        %419 = vmatpush1.msra.mxu0 0.0
        %420 = vmatprep.subr.mxu0 0.0
        %421 = vmatpush1.msra.mxu0 0.0
        %422 = vmatprep.subr.mxu0 0.0
        %423 = vmatpush1.msra.mxu0 0.0
        %424 = vmatprep.subr.mxu0 0.0
        %425 = vmatpush1.msra.mxu0 0.0
        %426 = vmatprep.subr.mxu0 0.0
        %427 = vmatpush1.msra.mxu0 0.0
        %428 = vmatprep.subr.mxu0 0.0
        %429 = vmatpush1.msra.mxu0 0.0
        %430 = vmatprep.subr.mxu0 0.0
        %431 = vmatpush1.msra.mxu0 0.0
        %432 = vmatprep.subr.mxu0 0.0
        %433 = vmatpush1.msra.mxu0 0.0
        %434 = vmatprep.subr.mxu0 0.0
        %435 = vmatpush1.msra.mxu0 0.0
        %436 = vmatprep.subr.mxu0 0.0
        %437 = vmatpush1.msra.mxu0 0.0
        %438 = vmatprep.subr.mxu0 0.0
        %439 = vmatpush1.msra.mxu0 0.0
        %440 = vmatprep.subr.mxu0 0.0
        %441 = vmatpush1.msra.mxu0 0.0
        %442 = vmatprep.subr.mxu0 0.0
        %443 = vmatpush1.msra.mxu0 0.0
        %444 = vmatprep.subr.mxu0 0.0
        %445 = vmatpush1.msra.mxu0 0.0
        %446 = vmatprep.subr.mxu0 0.0
        %447 = vmatpush1.msra.mxu0 0.0
        %448 = vmatprep.subr.mxu0 0.0
        %449 = vmatpush1.msra.mxu0 0.0
        %450 = vmatprep.subr.mxu0 0.0
        %451 = vmatpush1.msra.mxu0 0.0
        %452 = vmatprep.subr.mxu0 0.0
        %453 = vmatpush1.msra.mxu0 0.0
        %454 = vmatprep.subr.mxu0 0.0
        %455 = vmatpush1.msra.mxu0 0.0
        %456 = vmatprep.subr.mxu0 0.0
        %457 = vmatpush1.msra.mxu0 0.0
        %458 = vmatprep.subr.mxu0 0.0
        %459 = vmatpush1.msra.mxu0 0.0
        %460 = vmatprep.subr.mxu0 0.0
        %461 = vmatpush1.msra.mxu0 0.0
        %462 = vmatprep.subr.mxu0 0.0
        %463 = vmatpush1.msra.mxu0 0.0
        %464 = vmatprep.subr.mxu0 0.0
        %465 = vmatpush1.msra.mxu0 0.0
        %466 = vmatprep.mubr.f32.mxu0 0.0
        %467 = vmatmul.mubr.f32.gmra.mrb[0].mxu0 %v397
        %v468 = vpop.f32.mrb[0].mxu0
        %v469 = vadd.f32 0.0, %v468
        %v470 = vpop.f32.mrb[0].mxu0
        %v471 = vadd.f32 0.0, %v470
        %472 = vmatprep.mubr.f32.mxu0 0.0
        %473 = vmatmul.mubr.f32.gmra.mrb[0].mxu0 %v400
        %v474 = vpop.f32.mrb[0].mxu0
        %v475 = vadd.f32 0.0, %v474
        %v476 = vpop.f32.mrb[0].mxu0
        %v477 = vadd.f32 0.0, %v476
        %478 = vdwg.mxu0
        %v479 = vmul.f32 %v469, %v262
        %v480 = vmul.f32 %v471, %v263
        %v481 = vmul.f32 %v475, %v264
        %v482 = vmul.f32 %v477, %v265
        %v483 = vadd.f32 %v479, %v481
        %v484 = vrot.slane %v483, 4
        %v485 = vadd.f32 %v483, %v484
        %v486 = vrot.slane %v485, 2
        %v487 = vadd.f32 %v485, %v486
        %v488 = vrot.slane %v487, 1
        %v489 = vadd.f32 %v487, %v488
        %v490 = vadd.f32 %v480, %v482
        %v491 = vrot.slane %v490, 4
        %v492 = vadd.f32 %v490, %v491
        %v493 = vrot.slane %v492, 2
        %v494 = vadd.f32 %v492, %v493
        %v495 = vrot.slane %v494, 1
        %v496 = vadd.f32 %v494, %v495
        %v499 = vcombine.low %v489, %v496
        %v501 = vunpack.c.l.s4 1966171168
        %v502 = vunpack.c.0.s8 %v501
        %v503 = vlaneseq
        %v504 = vshrl.u32 %v503, 7
        %v505 = vsub.s32 %v502, %v504
        %v506 = vrot.slane %v499, %v505
        %v508 = vunpack.c.l.s4 1966171168
        %v509 = vunpack.c.0.s8 %v508
        %v510 = vlaneseq
        %v511 = vshrl.u32 %v510, 7
        %v512 = vsub.s32 %v509, %v511
        %v513 = vrot.slane %v506, %v512
        %s515 = scalar_lea.vmem %s217, 1 [#allocation7]
        %516 = vst.msk [vmem:[%s515] ss:$4 sm:$0x3] %vm391, %v513
        %s517 = scalar_lea.vmem %s192, 32 [#allocation5]
        %v518 = vld [vmem:[%s517] sm:$0xff]
        %v519 = vld [vmem:[%s517 + $0x8] sm:$0xff]
        %v521 = vsel %vm268, %v518, 0
        %v524 = vsel %vm268, %v519, 0
        %526 = vmatprep.subr.mxu0 %v243
        %527 = vmatpush1.msra.mxu0 %v242
        %528 = vmatprep.subr.mxu0 %v245
        %529 = vmatpush1.msra.mxu0 %v244
        %530 = vmatprep.subr.mxu0 0.0
        %531 = vmatpush1.msra.mxu0 0.0
        %532 = vmatprep.subr.mxu0 0.0
        %533 = vmatpush1.msra.mxu0 0.0
        %534 = vmatprep.subr.mxu0 0.0
        %535 = vmatpush1.msra.mxu0 0.0
        %536 = vmatprep.subr.mxu0 0.0
        %537 = vmatpush1.msra.mxu0 0.0
        %538 = vmatprep.subr.mxu0 0.0
        %539 = vmatpush1.msra.mxu0 0.0
        %540 = vmatprep.subr.mxu0 0.0
        %541 = vmatpush1.msra.mxu0 0.0
        %542 = vmatprep.subr.mxu0 0.0
        %543 = vmatpush1.msra.mxu0 0.0
        %544 = vmatprep.subr.mxu0 0.0
        %545 = vmatpush1.msra.mxu0 0.0
        %546 = vmatprep.subr.mxu0 0.0
        %547 = vmatpush1.msra.mxu0 0.0
        %548 = vmatprep.subr.mxu0 0.0
        %549 = vmatpush1.msra.mxu0 0.0
        %550 = vmatprep.subr.mxu0 0.0
        %551 = vmatpush1.msra.mxu0 0.0
        %552 = vmatprep.subr.mxu0 0.0
        %553 = vmatpush1.msra.mxu0 0.0
        %554 = vmatprep.subr.mxu0 0.0
        %555 = vmatpush1.msra.mxu0 0.0
        %556 = vmatprep.subr.mxu0 0.0
        %557 = vmatpush1.msra.mxu0 0.0
        %558 = vmatprep.subr.mxu0 0.0
        %559 = vmatpush1.msra.mxu0 0.0
        %560 = vmatprep.subr.mxu0 0.0
        %561 = vmatpush1.msra.mxu0 0.0
        %562 = vmatprep.subr.mxu0 0.0
        %563 = vmatpush1.msra.mxu0 0.0
        %564 = vmatprep.subr.mxu0 0.0
        %565 = vmatpush1.msra.mxu0 0.0
        %566 = vmatprep.subr.mxu0 0.0
        %567 = vmatpush1.msra.mxu0 0.0
        %568 = vmatprep.subr.mxu0 0.0
        %569 = vmatpush1.msra.mxu0 0.0
        %570 = vmatprep.subr.mxu0 0.0
        %571 = vmatpush1.msra.mxu0 0.0
        %572 = vmatprep.subr.mxu0 0.0
        %573 = vmatpush1.msra.mxu0 0.0
        %574 = vmatprep.subr.mxu0 0.0
        %575 = vmatpush1.msra.mxu0 0.0
        %576 = vmatprep.subr.mxu0 0.0
        %577 = vmatpush1.msra.mxu0 0.0
        %578 = vmatprep.subr.mxu0 0.0
        %579 = vmatpush1.msra.mxu0 0.0
        %580 = vmatprep.subr.mxu0 0.0
        %581 = vmatpush1.msra.mxu0 0.0
        %582 = vmatprep.subr.mxu0 0.0
        %583 = vmatpush1.msra.mxu0 0.0
        %584 = vmatprep.subr.mxu0 0.0
        %585 = vmatpush1.msra.mxu0 0.0
        %586 = vmatprep.subr.mxu0 0.0
        %587 = vmatpush1.msra.mxu0 0.0
        %588 = vmatprep.subr.mxu0 0.0
        %589 = vmatpush1.msra.mxu0 0.0
        %590 = vmatprep.mubr.f32.mxu0 0.0
        %591 = vmatmul.mubr.f32.gmra.mrb[0].mxu0 %v521
        %v592 = vpop.f32.mrb[0].mxu0
        %v593 = vadd.f32 0.0, %v592
        %v594 = vpop.f32.mrb[0].mxu0
        %v595 = vadd.f32 0.0, %v594
        %596 = vmatprep.mubr.f32.mxu0 0.0
        %597 = vmatmul.mubr.f32.gmra.mrb[0].mxu0 %v524
        %v598 = vpop.f32.mrb[0].mxu0
        %v599 = vadd.f32 0.0, %v598
        %v600 = vpop.f32.mrb[0].mxu0
        %v601 = vadd.f32 0.0, %v600
        %602 = vdwg.mxu0
        %v603 = vmul.f32 %v593, %v262
        %v604 = vmul.f32 %v595, %v263
        %v605 = vmul.f32 %v599, %v264
        %v606 = vmul.f32 %v601, %v265
        %v607 = vadd.f32 %v603, %v605
        %v608 = vrot.slane %v607, 4
        %v609 = vadd.f32 %v607, %v608
        %v610 = vrot.slane %v609, 2
        %v611 = vadd.f32 %v609, %v610
        %v612 = vrot.slane %v611, 1
        %v613 = vadd.f32 %v611, %v612
        %v614 = vadd.f32 %v604, %v606
        %v615 = vrot.slane %v614, 4
        %v616 = vadd.f32 %v614, %v615
        %v617 = vrot.slane %v616, 2
        %v618 = vadd.f32 %v616, %v617
        %v619 = vrot.slane %v618, 1
        %v620 = vadd.f32 %v618, %v619
        %v623 = vcombine.low %v613, %v620
        %v625 = vunpack.c.l.s4 1966171168
        %v626 = vunpack.c.0.s8 %v625
        %v627 = vlaneseq
        %v628 = vshrl.u32 %v627, 7
        %v629 = vsub.s32 %v626, %v628
        %v630 = vrot.slane %v623, %v629
        %v632 = vunpack.c.l.s4 1966171168
        %v633 = vunpack.c.0.s8 %v632
        %v634 = vlaneseq
        %v635 = vshrl.u32 %v634, 7
        %v636 = vsub.s32 %v633, %v635
        %v637 = vrot.slane %v630, %v636
        %s639 = scalar_lea.vmem %s217, 2 [#allocation7]
        %640 = vst.msk [vmem:[%s639] ss:$4 sm:$0x3] %vm391, %v637
        %s641 = scalar_lea.vmem %s192, 48 [#allocation5]
        %v642 = vld [vmem:[%s641] sm:$0xff]
        %v643 = vld [vmem:[%s641 + $0x8] sm:$0xff]
        %v645 = vsel %vm268, %v642, 0
        %v648 = vsel %vm268, %v643, 0
        %650 = vmatprep.subr.mxu0 %v243
        %651 = vmatpush1.msra.mxu0 %v242
        %652 = vmatprep.subr.mxu0 %v245
        %653 = vmatpush1.msra.mxu0 %v244
        %654 = vmatprep.subr.mxu0 0.0
        %655 = vmatpush1.msra.mxu0 0.0
        %656 = vmatprep.subr.mxu0 0.0
        %657 = vmatpush1.msra.mxu0 0.0
        %658 = vmatprep.subr.mxu0 0.0
        %659 = vmatpush1.msra.mxu0 0.0
        %660 = vmatprep.subr.mxu0 0.0
        %661 = vmatpush1.msra.mxu0 0.0
        %662 = vmatprep.subr.mxu0 0.0
        %663 = vmatpush1.msra.mxu0 0.0
        %664 = vmatprep.subr.mxu0 0.0
        %665 = vmatpush1.msra.mxu0 0.0
        %666 = vmatprep.subr.mxu0 0.0
        %667 = vmatpush1.msra.mxu0 0.0
        %668 = vmatprep.subr.mxu0 0.0
        %669 = vmatpush1.msra.mxu0 0.0
        %670 = vmatprep.subr.mxu0 0.0
        %671 = vmatpush1.msra.mxu0 0.0
        %672 = vmatprep.subr.mxu0 0.0
        %673 = vmatpush1.msra.mxu0 0.0
        %674 = vmatprep.subr.mxu0 0.0
        %675 = vmatpush1.msra.mxu0 0.0
        %676 = vmatprep.subr.mxu0 0.0
        %677 = vmatpush1.msra.mxu0 0.0
        %678 = vmatprep.subr.mxu0 0.0
        %679 = vmatpush1.msra.mxu0 0.0
        %680 = vmatprep.subr.mxu0 0.0
        %681 = vmatpush1.msra.mxu0 0.0
        %682 = vmatprep.subr.mxu0 0.0
        %683 = vmatpush1.msra.mxu0 0.0
        %684 = vmatprep.subr.mxu0 0.0
        %685 = vmatpush1.msra.mxu0 0.0
        %686 = vmatprep.subr.mxu0 0.0
        %687 = vmatpush1.msra.mxu0 0.0
        %688 = vmatprep.subr.mxu0 0.0
        %689 = vmatpush1.msra.mxu0 0.0
        %690 = vmatprep.subr.mxu0 0.0
        %691 = vmatpush1.msra.mxu0 0.0
        %692 = vmatprep.subr.mxu0 0.0
        %693 = vmatpush1.msra.mxu0 0.0
        %694 = vmatprep.subr.mxu0 0.0
        %695 = vmatpush1.msra.mxu0 0.0
        %696 = vmatprep.subr.mxu0 0.0
        %697 = vmatpush1.msra.mxu0 0.0
        %698 = vmatprep.subr.mxu0 0.0
        %699 = vmatpush1.msra.mxu0 0.0
        %700 = vmatprep.subr.mxu0 0.0
        %701 = vmatpush1.msra.mxu0 0.0
        %702 = vmatprep.subr.mxu0 0.0
        %703 = vmatpush1.msra.mxu0 0.0
        %704 = vmatprep.subr.mxu0 0.0
        %705 = vmatpush1.msra.mxu0 0.0
        %706 = vmatprep.subr.mxu0 0.0
        %707 = vmatpush1.msra.mxu0 0.0
        %708 = vmatprep.subr.mxu0 0.0
        %709 = vmatpush1.msra.mxu0 0.0
        %710 = vmatprep.subr.mxu0 0.0
        %711 = vmatpush1.msra.mxu0 0.0
        %712 = vmatprep.subr.mxu0 0.0
        %713 = vmatpush1.msra.mxu0 0.0
        %714 = vmatprep.mubr.f32.mxu0 0.0
        %715 = vmatmul.mubr.f32.gmra.mrb[0].mxu0 %v645
        %v716 = vpop.f32.mrb[0].mxu0
        %v717 = vadd.f32 0.0, %v716
        %v718 = vpop.f32.mrb[0].mxu0
        %v719 = vadd.f32 0.0, %v718
        %720 = vmatprep.mubr.f32.mxu0 0.0
        %721 = vmatmul.mubr.f32.gmra.mrb[0].mxu0 %v648
        %v722 = vpop.f32.mrb[0].mxu0
        %v723 = vadd.f32 0.0, %v722
        %v724 = vpop.f32.mrb[0].mxu0
        %v725 = vadd.f32 0.0, %v724
        %726 = vdwg.mxu0
        %v727 = vmul.f32 %v717, %v262
        %v728 = vmul.f32 %v719, %v263
        %v729 = vmul.f32 %v723, %v264
        %v730 = vmul.f32 %v725, %v265
        %v731 = vadd.f32 %v727, %v729
        %v732 = vrot.slane %v731, 4
        %v733 = vadd.f32 %v731, %v732
        %v734 = vrot.slane %v733, 2
        %v735 = vadd.f32 %v733, %v734
        %v736 = vrot.slane %v735, 1
        %v737 = vadd.f32 %v735, %v736
        %v738 = vadd.f32 %v728, %v730
        %v739 = vrot.slane %v738, 4
        %v740 = vadd.f32 %v738, %v739
        %v741 = vrot.slane %v740, 2
        %v742 = vadd.f32 %v740, %v741
        %v743 = vrot.slane %v742, 1
        %v744 = vadd.f32 %v742, %v743
        %v747 = vcombine.low %v737, %v744
        %v749 = vunpack.c.l.s4 1966171168
        %v750 = vunpack.c.0.s8 %v749
        %v751 = vlaneseq
        %v752 = vshrl.u32 %v751, 7
        %v753 = vsub.s32 %v750, %v752
        %v754 = vrot.slane %v747, %v753
        %v756 = vunpack.c.l.s4 1966171168
        %v757 = vunpack.c.0.s8 %v756
        %v758 = vlaneseq
        %v759 = vshrl.u32 %v758, 7
        %v760 = vsub.s32 %v757, %v759
        %v761 = vrot.slane %v754, %v760
        %s763 = scalar_lea.vmem %s217, 3 [#allocation7]
        %764 = vst.msk [vmem:[%s763] ss:$4 sm:$0x3] %vm391, %v761
        %s765 = sand.u32 %s98, 1
        %s766 = scalar_lea.sflag [#allocation4], %s765
        %s767 = sand.u32 %s98, 1
        %s768 = smul.addr %s767, 8
        %s769 = scalar_lea.vmem [#allocation7], %s768
        // Predicated region
        $region37: #{tpu_custom_call.1} parent=27 // pred_check
          %p770 = pneg %p108
        $region38: #{tpu_custom_call.1} parent=27 // pred_check_branch
          %772 = sbr.rel (%p770) target = $region40
        $region39: #{tpu_custom_call.1} parent=27 // pred_region
          %s773 = smul.u32 2, %s27
          %s775 = ssub.s32 128, 128
          %776 = vsyncadd %s766, %s775
          %s777 = smul.addr %s26, 2
          %s778 = sadd.s32 %s773, %s777
          %s779 = smul.addr %s778, 64
          %s780 = scalar_lea.hbm %s2, %s779
          %s782 = sshll.u32 %s769, 4
          %s783 = int_to_ptr.vmem [resolvable:$true] %s782
          %785 = dma.vmem_to_hbm [thread:$0]  %s783, 128, %s780, %s766
        $region40: #{tpu_custom_call.1} parent=27 // pred_fallthru
          _
      $region28: #{tpu_custom_call.1} parent=5 // pred_fallthru
        _
      %p786 = scmp.le.s32.totalorder 2, %s17
      // Predicated region
      $region41: #{tpu_custom_call.1} parent=5 // pred_check
        %p787 = pneg %p786
      $region42: #{tpu_custom_call.1} parent=5 // pred_check_branch
        %789 = sbr.rel (%p787) target = $region44
      $region43: #{tpu_custom_call.1} parent=5 // pred_region
        %s790 = ssub.s32 %s17, 2
        // Predicated region
        $region45: #{tpu_custom_call.1} parent=43 // pred_check
          %p791 = pneg %p114
        $region46: #{tpu_custom_call.1} parent=43 // pred_check_branch
          %793 = sbr.rel (%p791) target = $region48
        $region47: #{tpu_custom_call.1} parent=43 // pred_region
          %s794 = sand.u32 %s99, 1
          %s795 = scalar_lea.sflag [#allocation4], %s794
          %s796 = sand.u32 %s99, 1
          %s797 = smul.addr %s796, 8
          %s798 = scalar_lea.vmem [#allocation7], %s797
          %799 = dma.done %s795, 128
        $region48: #{tpu_custom_call.1} parent=43 // pred_fallthru
          _
      $region44: #{tpu_custom_call.1} parent=5 // pred_fallthru
        _
    $region6: #{tpu_custom_call.1} parent=1 // loop_footer
      %s21 = sadd.s32 1, %s17
    $region7: #{tpu_custom_call.1} parent=1 // loop_footer_branch
      %16 = sbr.rel target = $region3
    $region8: #{tpu_custom_call.1} parent=1 // loop_exit
      _
    %800 = vsyncpa [#allocation3], 1
    %s801 = scalar_lea.sflag [#allocation3], 1
    %802 = vsyncpa %s801, 1
    %803 = vsyncpa [#allocation6], 1
    %s804 = scalar_lea.sflag [#allocation6], 1
    %805 = vsyncpa %s804, 1
    %806 = vsyncpa [#allocation4], 1
    %s807 = scalar_lea.sflag [#allocation4], 1
    %808 = vsyncpa %s807, 1

</llo_original>
